<compile_context>
chip_gen: v6e
topology: v6e:2x2x1
jax: 0.10.0
libtpu: 0.0.40
codegen_flags: <defaults>
</compile_context>

<pallas_src>
import numpy as np
import jax
import jax.numpy as jnp
from jax.experimental import pallas as pl
from jax.experimental.pallas import tpu as pltpu

# ----------------------- module hyper-parameters (synthetic) -----------------
NUM_EMBEDDINGS = 64                                     # K
EMBEDDING_DIM  = 32                                     # d
NUM_HASHES     = 2                                      # k
NUM_BUCKETS    = NUM_EMBEDDINGS * NUM_HASHES // EMBEDDING_DIM   # default B = 4
B1             = NUM_BUCKETS + 1                        # shared table rows
APPEND_WEIGHT  = True
OUTPUT_DIM     = EMBEDDING_DIM + (NUM_HASHES if APPEND_WEIGHT else 0)

# Deterministic universal-hash family parameters ((a*x + b) mod p) mod B
MODULER = 1_000_003                                     # prime, p >> B
HASH_A  = (7919, 104729)
HASH_B  = (50021, 611953)

_K_POW2 = (NUM_EMBEDDINGS & (NUM_EMBEDDINGS - 1)) == 0
_B_POW2 = (NUM_BUCKETS & (NUM_BUCKETS - 1)) == 0


def _hash_bucket(ids, a, b):
    """((a*ids + b) % MODULER) % NUM_BUCKETS, exact for any non-negative int32 id.

    The multiply is split so every intermediate stays < 2**31, matching the
    int64 / LongTensor reference (fixes the int32-overflow divergence)."""
    y = ids % MODULER                       # < MODULER (~2**20)
    y_hi = y >> 10                          # < MODULER / 1024
    y_lo = y & 0x3FF
    t_hi = (((a * y_hi) % MODULER) * 1024) % MODULER    # a*y_hi*1024 mod p
    t_lo = (a * y_lo) % MODULER                          # a*y_lo      mod p
    s = (t_hi + t_lo + b) % MODULER                      # == (a*ids + b) mod p
    if _B_POW2:
        return s & (NUM_BUCKETS - 1)        # power-of-2 modulo -> single AND
    return s % NUM_BUCKETS


# ----------------------------- Pallas kernel ---------------------------------
def hash_embedding_kernel(ids_ref, emb_ref, impT_ref, word_ref, p_ref):
    # ids_ref  : (tT, 1)  int32   token ids for this tile
    # emb_ref  : (B1, D)  f32     shared pool E (VMEM resident across tiles)
    # impT_ref : (H, K)   f32     importance weights P, transposed
    # word_ref : (tT, D)  f32     aggregated word embedding
    # p_ref    : (tT, H)  f32     gathered importance weights (appended in wrapper)
    ids = ids_ref[...]                                    # (tT, 1)
    tT = ids.shape[0]
    E = emb_ref[...]                                      # hoisted: loaded once per tile
    Pt = impT_ref[...]

    # --- importance gather P[ids % K, i]: one-hot mask + lane reduction ------
    imp_idx = (ids & (NUM_EMBEDDINGS - 1)) if _K_POW2 else (ids % NUM_EMBEDDINGS)
    iota_k = jax.lax.broadcasted_iota(jnp.int32, (tT, NUM_EMBEDDINGS), 1)
    onehot_k = (imp_idx == iota_k).astype(jnp.float32)    # (tT, K)
    p_cols = [
        jnp.sum(onehot_k * Pt[i:i + 1, :], axis=-1, keepdims=True)  # (tT, 1)
        for i in range(NUM_HASHES)
    ]

    # --- fused hash gathers: combined per-bucket weight matrix ---------------
    #     W[t, b] = sum_i p_i[t] * [h_i(id_t) == b]
    is_zero = ids == 0
    iota_b = jax.lax.broadcasted_iota(jnp.int32, (tT, B1), 1)
    w_comb = jnp.zeros((tT, B1), jnp.float32)
    for i in range(NUM_HASHES):                           # static unroll (k small)
        h = _hash_bucket(ids, HASH_A[i], HASH_B[i])
        h = jnp.where(is_zero, 0, h)                      # masked_fill_(input == 0, 0)
        w_comb = w_comb + p_cols[i] * (h == iota_b).astype(jnp.float32)

    # --- word = W @ E as B1 unrolled VPU broadcast-FMAs (B1 tiny: skip MXU) ---
    word = w_comb[:, 0:1] * E[0:1, :]
    for bkt in range(1, B1):
        word = word + w_comb[:, bkt:bkt + 1] * E[bkt:bkt + 1, :]
    word_ref[...] = word                                  # single full-block store

    # --- importance-weight output, built as a full (tT, H) slab --------------
    iota_h = jax.lax.broadcasted_iota(jnp.int32, (tT, NUM_HASHES), 1)
    p_out = jnp.zeros((tT, NUM_HASHES), jnp.float32)
    for i in range(NUM_HASHES):
        p_out = p_out + jnp.where(iota_h == i, p_cols[i], 0.0)
    p_ref[...] = p_out


# ------------------------------ wrapper ---------------------------------------
def _round_up(x, m):
    return ((x + m - 1) // m) * m


def hash_embedding(ids_2d, shared_emb, importance, *, tile_tokens=512):
    """HashEmbedding forward. ids_2d: (N, W) int -> (N, W, OUTPUT_DIM) f32."""
    N, W = ids_2d.shape
    T = N * W
    # Token tile: big enough to pipeline well, small enough for v7x's 64 MiB VMEM
    # (tables + one-hots + outputs per tile stay well under the scoped default).
    tT = min(tile_tokens, _round_up(T, 8))
    T_pad = _round_up(T, tT)

    ids_flat = ids_2d.reshape(-1).astype(jnp.int32)
    if T_pad > T:
        ids_flat = jnp.pad(ids_flat, (0, T_pad - T))      # pad ids are 0 (harmless)
    ids_flat = ids_flat.reshape(T_pad, 1)
    imp_t = jnp.transpose(importance)                     # (H, K)

    word, p = pl.pallas_call(
        hash_embedding_kernel,
        out_shape=(
            jax.ShapeDtypeStruct((T_pad, EMBEDDING_DIM), jnp.float32),
            jax.ShapeDtypeStruct((T_pad, NUM_HASHES), jnp.float32),
        ),
        grid_spec=pltpu.PrefetchScalarGridSpec(
            num_scalar_prefetch=0,
            grid=(T_pad // tT,),                          # tiled token axis -> pipelined
            in_specs=[
                pl.BlockSpec((tT, 1), lambda i: (i, 0)),                      # ids tile
                pl.BlockSpec((B1, EMBEDDING_DIM), lambda i: (0, 0)),          # E resident
                pl.BlockSpec((NUM_HASHES, NUM_EMBEDDINGS), lambda i: (0, 0)), # P^T resident
            ],
            out_specs=[
                pl.BlockSpec((tT, EMBEDDING_DIM), lambda i: (i, 0)),
                pl.BlockSpec((tT, NUM_HASHES), lambda i: (i, 0)),
            ],
        ),
        compiler_params=pltpu.CompilerParams(
            dimension_semantics=("parallel",),            # shard token tiles over v7x's 2 TCs
        ),
    )(ids_flat, shared_emb, imp_t)

    if APPEND_WEIGHT:
        out = jnp.concatenate([word[:T], p[:T]], axis=-1)
    else:
        out = word[:T]
    return out.reshape(N, W, OUTPUT_DIM)


# --------------------------- numpy reference ----------------------------------
def ref_forward(ids_np, emb_np, imp_np):
    ids64 = ids_np.astype(np.int64)
    idx_imp = ids64 % NUM_EMBEDDINGS
    p = imp_np[idx_imp].astype(np.float64)                # (N, W, H)
    word = np.zeros(ids_np.shape + (EMBEDDING_DIM,), np.float64)
    for i in range(NUM_HASHES):
        h = ((HASH_A[i] * ids64 + HASH_B[i]) % MODULER) % NUM_BUCKETS
        h = np.where(ids64 == 0, 0, h)
        word += p[..., i:i + 1] * emb_np[h].astype(np.float64)
    if APPEND_WEIGHT:
        out = np.concatenate([word, p], axis=-1)
    else:
        out = word
    return out.astype(np.float32)


# ------------------------------- main ------------------------------------------
if __name__ == "__main__":
    key = jax.random.PRNGKey(0)
    k_emb, k_imp, k_ids, k_big = jax.random.split(key, 4)

    # reset_parameters(): shared ~ N(0, 0.1), importance ~ N(0, 5e-4)
    shared_emb = 0.1 * jax.random.normal(k_emb, (B1, EMBEDDING_DIM), jnp.float32)
    importance = 5e-4 * jax.random.normal(k_imp, (NUM_EMBEDDINGS, NUM_HASHES), jnp.float32)

    # Small LongTensor-style input (N, W); include a 0 to exercise the zero mask.
    N, W = 2, 8
    ids = jax.random.randint(k_ids, (N, W), 0, 500, dtype=jnp.int32)
    ids = ids.at[0, 0].set(0)

    out = jax.block_until_ready(hash_embedding(ids, shared_emb, importance))
    expected = ref_forward(np.asarray(ids), np.asarray(shared_emb), np.asarray(importance))
    np.testing.assert_allclose(np.asarray(out), expected, rtol=1e-5, atol=1e-6)

    # Larger check: multi-tile grid + token padding + full int32 id range
    # (exercises the 32-bit-safe hash vs the int64 reference).
    N2, W2 = 3, 400
    ids_big = jax.random.randint(k_big, (N2, W2), 0, 2**31 - 1, dtype=jnp.int32)
    ids_big = ids_big.at[0, 0].set(0)
    out_big = jax.block_until_ready(hash_embedding(ids_big, shared_emb, importance))
    expected_big = ref_forward(np.asarray(ids_big), np.asarray(shared_emb), np.asarray(importance))
    np.testing.assert_allclose(np.asarray(out_big), expected_big, rtol=1e-5, atol=1e-6)

    print("KERNEL_OK")
</pallas_src>

<mosaic_0001>
module attributes {stable_mosaic.version = 11 : i64} {
  func.func @hash_embedding_kernel(%arg0: i32, %arg1: memref<16x1xi32, #tpu.memory_space<vmem>>, %arg2: memref<5x32xf32, #tpu.memory_space<vmem>>, %arg3: memref<2x64xf32, #tpu.memory_space<vmem>>, %arg4: memref<16x32xf32, #tpu.memory_space<vmem>>, %arg5: memref<16x2xf32, #tpu.memory_space<vmem>>) attributes {dimension_semantics = [#tpu.dimension_semantics<parallel>], iteration_bounds = array<i64: 1>, scalar_prefetch = 0 : i64, scratch_operands = 0 : i64, tpu.core_type = #tpu.core_type<tc>, window_params = [{transform_indices = @transform_0, window_bounds = array<i64: 16, 1>}, {pipeline_mode = #tpu.pipeline_mode<synchronous>, transform_indices = @transform_1, window_bounds = array<i64: 5, 32>}, {pipeline_mode = #tpu.pipeline_mode<synchronous>, transform_indices = @transform_2, window_bounds = array<i64: 2, 64>}, {transform_indices = @transform_3, window_bounds = array<i64: 16, 32>}, {transform_indices = @transform_4, window_bounds = array<i64: 16, 2>}]} {
    %c0 = arith.constant 0 : index
    %c0_0 = arith.constant 0 : index
    %0 = vector.load %arg1[%c0, %c0_0] : memref<16x1xi32, #tpu.memory_space<vmem>>, vector<16x1xi32>
    %c0_1 = arith.constant 0 : index
    %c0_2 = arith.constant 0 : index
    %1 = vector.load %arg2[%c0_1, %c0_2] : memref<5x32xf32, #tpu.memory_space<vmem>>, vector<5x32xf32>
    %c0_3 = arith.constant 0 : index
    %c0_4 = arith.constant 0 : index
    %2 = vector.load %arg3[%c0_3, %c0_4] : memref<2x64xf32, #tpu.memory_space<vmem>>, vector<2x64xf32>
    %c63_i32 = arith.constant 63 : i32
    %3 = vector.broadcast %c63_i32 : i32 to vector<16x1xi32>
    %4 = arith.andi %0, %3 : vector<16x1xi32>
    %5 = tpu.iota {dimensions = array<i32: 1>} : vector<16x64xi32>
    %6 = vector.broadcast %4 : vector<16x1xi32> to vector<16x64xi32>
    %7 = arith.cmpi eq, %6, %5 : vector<16x64xi32>
    %8 = arith.extui %7 : vector<16x64xi1> to vector<16x64xi32>
    %9 = arith.sitofp %8 : vector<16x64xi32> to vector<16x64xf32>
    %10 = vector.extract_strided_slice %2 {offsets = [0, 0], sizes = [1, 64], strides = [1, 1]} : vector<2x64xf32> to vector<1x64xf32>
    %11 = vector.broadcast %10 : vector<1x64xf32> to vector<16x64xf32>
    %12 = arith.mulf %9, %11 : vector<16x64xf32>
    %cst = arith.constant dense<0.000000e+00> : vector<16xf32>
    %13 = vector.multi_reduction <add>, %12, %cst [1] : vector<16x64xf32> to vector<16xf32>
    %14 = vector.shape_cast %13 : vector<16xf32> to vector<16x1xf32>
    %15 = vector.extract_strided_slice %2 {offsets = [1, 0], sizes = [1, 64], strides = [1, 1]} : vector<2x64xf32> to vector<1x64xf32>
    %16 = vector.broadcast %15 : vector<1x64xf32> to vector<16x64xf32>
    %17 = arith.mulf %9, %16 : vector<16x64xf32>
    %cst_5 = arith.constant dense<0.000000e+00> : vector<16xf32>
    %18 = vector.multi_reduction <add>, %17, %cst_5 [1] : vector<16x64xf32> to vector<16xf32>
    %19 = vector.shape_cast %18 : vector<16xf32> to vector<16x1xf32>
    %c0_i32 = arith.constant 0 : i32
    %20 = vector.broadcast %c0_i32 : i32 to vector<16x1xi32>
    %21 = arith.cmpi eq, %0, %20 : vector<16x1xi32>
    %22 = tpu.iota {dimensions = array<i32: 1>} : vector<16x5xi32>
    %cst_6 = arith.constant 0.000000e+00 : f32
    %23 = vector.broadcast %cst_6 : f32 to vector<16x5xf32>
    %c1000003_i32 = arith.constant 1000003 : i32
    %c0_i32_7 = arith.constant 0 : i32
    %24 = arith.cmpi eq, %c1000003_i32, %c0_i32_7 : i32
    %c1_i32 = arith.constant 1 : i32
    %25 = arith.select %24, %c1_i32, %c1000003_i32 : i32
    %26 = vector.broadcast %25 : i32 to vector<16x1xi32>
    %27 = arith.remsi %0, %26 : vector<16x1xi32>
    %c0_i32_8 = arith.constant 0 : i32
    %28 = vector.broadcast %c0_i32_8 : i32 to vector<16x1xi32>
    %29 = arith.cmpi ne, %27, %28 : vector<16x1xi32>
    %c0_i32_9 = arith.constant 0 : i32
    %30 = vector.broadcast %c0_i32_9 : i32 to vector<16x1xi32>
    %31 = arith.cmpi slt, %27, %30 : vector<16x1xi32>
    %c0_i32_10 = arith.constant 0 : i32
    %32 = arith.cmpi slt, %25, %c0_i32_10 : i32
    %33 = vector.broadcast %32 : i1 to vector<16x1xi1>
    %34 = vector.broadcast %33 : vector<16x1xi1> to vector<16x1xi1>
    %35 = arith.xori %31, %34 : vector<16x1xi1>
    %36 = arith.andi %35, %29 : vector<16x1xi1>
    %37 = vector.broadcast %25 : i32 to vector<16x1xi32>
    %38 = arith.addi %27, %37 : vector<16x1xi32>
    %39 = arith.select %36, %38, %27 : vector<16x1xi1>, vector<16x1xi32>
    %c10_i32 = arith.constant 10 : i32
    %40 = vector.broadcast %c10_i32 : i32 to vector<16x1xi32>
    %41 = arith.shrsi %39, %40 : vector<16x1xi32>
    %c1023_i32 = arith.constant 1023 : i32
    %42 = vector.broadcast %c1023_i32 : i32 to vector<16x1xi32>
    %43 = arith.andi %39, %42 : vector<16x1xi32>
    %c7919_i32 = arith.constant 7919 : i32
    %44 = vector.broadcast %c7919_i32 : i32 to vector<16x1xi32>
    %45 = arith.muli %44, %41 : vector<16x1xi32>
    %c1000003_i32_11 = arith.constant 1000003 : i32
    %c0_i32_12 = arith.constant 0 : i32
    %46 = arith.cmpi eq, %c1000003_i32_11, %c0_i32_12 : i32
    %c1_i32_13 = arith.constant 1 : i32
    %47 = arith.select %46, %c1_i32_13, %c1000003_i32_11 : i32
    %48 = vector.broadcast %47 : i32 to vector<16x1xi32>
    %49 = arith.remsi %45, %48 : vector<16x1xi32>
    %c0_i32_14 = arith.constant 0 : i32
    %50 = vector.broadcast %c0_i32_14 : i32 to vector<16x1xi32>
    %51 = arith.cmpi ne, %49, %50 : vector<16x1xi32>
    %c0_i32_15 = arith.constant 0 : i32
    %52 = vector.broadcast %c0_i32_15 : i32 to vector<16x1xi32>
    %53 = arith.cmpi slt, %49, %52 : vector<16x1xi32>
    %c0_i32_16 = arith.constant 0 : i32
    %54 = arith.cmpi slt, %47, %c0_i32_16 : i32
    %55 = vector.broadcast %54 : i1 to vector<16x1xi1>
    %56 = vector.broadcast %55 : vector<16x1xi1> to vector<16x1xi1>
    %57 = arith.xori %53, %56 : vector<16x1xi1>
    %58 = arith.andi %57, %51 : vector<16x1xi1>
    %59 = vector.broadcast %47 : i32 to vector<16x1xi32>
    %60 = arith.addi %49, %59 : vector<16x1xi32>
    %61 = arith.select %58, %60, %49 : vector<16x1xi1>, vector<16x1xi32>
    %c1024_i32 = arith.constant 1024 : i32
    %62 = vector.broadcast %c1024_i32 : i32 to vector<16x1xi32>
    %63 = arith.muli %61, %62 : vector<16x1xi32>
    %c1000003_i32_17 = arith.constant 1000003 : i32
    %c0_i32_18 = arith.constant 0 : i32
    %64 = arith.cmpi eq, %c1000003_i32_17, %c0_i32_18 : i32
    %c1_i32_19 = arith.constant 1 : i32
    %65 = arith.select %64, %c1_i32_19, %c1000003_i32_17 : i32
    %66 = vector.broadcast %65 : i32 to vector<16x1xi32>
    %67 = arith.remsi %63, %66 : vector<16x1xi32>
    %c0_i32_20 = arith.constant 0 : i32
    %68 = vector.broadcast %c0_i32_20 : i32 to vector<16x1xi32>
    %69 = arith.cmpi ne, %67, %68 : vector<16x1xi32>
    %c0_i32_21 = arith.constant 0 : i32
    %70 = vector.broadcast %c0_i32_21 : i32 to vector<16x1xi32>
    %71 = arith.cmpi slt, %67, %70 : vector<16x1xi32>
    %c0_i32_22 = arith.constant 0 : i32
    %72 = arith.cmpi slt, %65, %c0_i32_22 : i32
    %73 = vector.broadcast %72 : i1 to vector<16x1xi1>
    %74 = vector.broadcast %73 : vector<16x1xi1> to vector<16x1xi1>
    %75 = arith.xori %71, %74 : vector<16x1xi1>
    %76 = arith.andi %75, %69 : vector<16x1xi1>
    %77 = vector.broadcast %65 : i32 to vector<16x1xi32>
    %78 = arith.addi %67, %77 : vector<16x1xi32>
    %79 = arith.select %76, %78, %67 : vector<16x1xi1>, vector<16x1xi32>
    %c7919_i32_23 = arith.constant 7919 : i32
    %80 = vector.broadcast %c7919_i32_23 : i32 to vector<16x1xi32>
    %81 = arith.muli %80, %43 : vector<16x1xi32>
    %c1000003_i32_24 = arith.constant 1000003 : i32
    %c0_i32_25 = arith.constant 0 : i32
    %82 = arith.cmpi eq, %c1000003_i32_24, %c0_i32_25 : i32
    %c1_i32_26 = arith.constant 1 : i32
    %83 = arith.select %82, %c1_i32_26, %c1000003_i32_24 : i32
    %84 = vector.broadcast %83 : i32 to vector<16x1xi32>
    %85 = arith.remsi %81, %84 : vector<16x1xi32>
    %c0_i32_27 = arith.constant 0 : i32
    %86 = vector.broadcast %c0_i32_27 : i32 to vector<16x1xi32>
    %87 = arith.cmpi ne, %85, %86 : vector<16x1xi32>
    %c0_i32_28 = arith.constant 0 : i32
    %88 = vector.broadcast %c0_i32_28 : i32 to vector<16x1xi32>
    %89 = arith.cmpi slt, %85, %88 : vector<16x1xi32>
    %c0_i32_29 = arith.constant 0 : i32
    %90 = arith.cmpi slt, %83, %c0_i32_29 : i32
    %91 = vector.broadcast %90 : i1 to vector<16x1xi1>
    %92 = vector.broadcast %91 : vector<16x1xi1> to vector<16x1xi1>
    %93 = arith.xori %89, %92 : vector<16x1xi1>
    %94 = arith.andi %93, %87 : vector<16x1xi1>
    %95 = vector.broadcast %83 : i32 to vector<16x1xi32>
    %96 = arith.addi %85, %95 : vector<16x1xi32>
    %97 = arith.select %94, %96, %85 : vector<16x1xi1>, vector<16x1xi32>
    %98 = arith.addi %79, %97 : vector<16x1xi32>
    %c50021_i32 = arith.constant 50021 : i32
    %99 = vector.broadcast %c50021_i32 : i32 to vector<16x1xi32>
    %100 = arith.addi %98, %99 : vector<16x1xi32>
    %c1000003_i32_30 = arith.constant 1000003 : i32
    %c0_i32_31 = arith.constant 0 : i32
    %101 = arith.cmpi eq, %c1000003_i32_30, %c0_i32_31 : i32
    %c1_i32_32 = arith.constant 1 : i32
    %102 = arith.select %101, %c1_i32_32, %c1000003_i32_30 : i32
    %103 = vector.broadcast %102 : i32 to vector<16x1xi32>
    %104 = arith.remsi %100, %103 : vector<16x1xi32>
    %c0_i32_33 = arith.constant 0 : i32
    %105 = vector.broadcast %c0_i32_33 : i32 to vector<16x1xi32>
    %106 = arith.cmpi ne, %104, %105 : vector<16x1xi32>
    %c0_i32_34 = arith.constant 0 : i32
    %107 = vector.broadcast %c0_i32_34 : i32 to vector<16x1xi32>
    %108 = arith.cmpi slt, %104, %107 : vector<16x1xi32>
    %c0_i32_35 = arith.constant 0 : i32
    %109 = arith.cmpi slt, %102, %c0_i32_35 : i32
    %110 = vector.broadcast %109 : i1 to vector<16x1xi1>
    %111 = vector.broadcast %110 : vector<16x1xi1> to vector<16x1xi1>
    %112 = arith.xori %108, %111 : vector<16x1xi1>
    %113 = arith.andi %112, %106 : vector<16x1xi1>
    %114 = vector.broadcast %102 : i32 to vector<16x1xi32>
    %115 = arith.addi %104, %114 : vector<16x1xi32>
    %116 = arith.select %113, %115, %104 : vector<16x1xi1>, vector<16x1xi32>
    %c3_i32 = arith.constant 3 : i32
    %117 = vector.broadcast %c3_i32 : i32 to vector<16x1xi32>
    %118 = arith.andi %116, %117 : vector<16x1xi32>
    %c0_i32_36 = arith.constant 0 : i32
    %119 = vector.broadcast %c0_i32_36 : i32 to vector<16x1xi32>
    %120 = arith.select %21, %119, %118 : vector<16x1xi1>, vector<16x1xi32>
    %121 = vector.broadcast %120 : vector<16x1xi32> to vector<16x5xi32>
    %122 = arith.cmpi eq, %121, %22 : vector<16x5xi32>
    %123 = arith.extui %122 : vector<16x5xi1> to vector<16x5xi32>
    %124 = arith.sitofp %123 : vector<16x5xi32> to vector<16x5xf32>
    %125 = vector.broadcast %14 : vector<16x1xf32> to vector<16x5xf32>
    %126 = arith.mulf %125, %124 : vector<16x5xf32>
    %127 = arith.addf %23, %126 : vector<16x5xf32>
    %c1000003_i32_37 = arith.constant 1000003 : i32
    %c0_i32_38 = arith.constant 0 : i32
    %128 = arith.cmpi eq, %c1000003_i32_37, %c0_i32_38 : i32
    %c1_i32_39 = arith.constant 1 : i32
    %129 = arith.select %128, %c1_i32_39, %c1000003_i32_37 : i32
    %130 = vector.broadcast %129 : i32 to vector<16x1xi32>
    %131 = arith.remsi %0, %130 : vector<16x1xi32>
    %c0_i32_40 = arith.constant 0 : i32
    %132 = vector.broadcast %c0_i32_40 : i32 to vector<16x1xi32>
    %133 = arith.cmpi ne, %131, %132 : vector<16x1xi32>
    %c0_i32_41 = arith.constant 0 : i32
    %134 = vector.broadcast %c0_i32_41 : i32 to vector<16x1xi32>
    %135 = arith.cmpi slt, %131, %134 : vector<16x1xi32>
    %c0_i32_42 = arith.constant 0 : i32
    %136 = arith.cmpi slt, %129, %c0_i32_42 : i32
    %137 = vector.broadcast %136 : i1 to vector<16x1xi1>
    %138 = vector.broadcast %137 : vector<16x1xi1> to vector<16x1xi1>
    %139 = arith.xori %135, %138 : vector<16x1xi1>
    %140 = arith.andi %139, %133 : vector<16x1xi1>
    %141 = vector.broadcast %129 : i32 to vector<16x1xi32>
    %142 = arith.addi %131, %141 : vector<16x1xi32>
    %143 = arith.select %140, %142, %131 : vector<16x1xi1>, vector<16x1xi32>
    %c10_i32_43 = arith.constant 10 : i32
    %144 = vector.broadcast %c10_i32_43 : i32 to vector<16x1xi32>
    %145 = arith.shrsi %143, %144 : vector<16x1xi32>
    %c1023_i32_44 = arith.constant 1023 : i32
    %146 = vector.broadcast %c1023_i32_44 : i32 to vector<16x1xi32>
    %147 = arith.andi %143, %146 : vector<16x1xi32>
    %c104729_i32 = arith.constant 104729 : i32
    %148 = vector.broadcast %c104729_i32 : i32 to vector<16x1xi32>
    %149 = arith.muli %148, %145 : vector<16x1xi32>
    %c1000003_i32_45 = arith.constant 1000003 : i32
    %c0_i32_46 = arith.constant 0 : i32
    %150 = arith.cmpi eq, %c1000003_i32_45, %c0_i32_46 : i32
    %c1_i32_47 = arith.constant 1 : i32
    %151 = arith.select %150, %c1_i32_47, %c1000003_i32_45 : i32
    %152 = vector.broadcast %151 : i32 to vector<16x1xi32>
    %153 = arith.remsi %149, %152 : vector<16x1xi32>
    %c0_i32_48 = arith.constant 0 : i32
    %154 = vector.broadcast %c0_i32_48 : i32 to vector<16x1xi32>
    %155 = arith.cmpi ne, %153, %154 : vector<16x1xi32>
    %c0_i32_49 = arith.constant 0 : i32
    %156 = vector.broadcast %c0_i32_49 : i32 to vector<16x1xi32>
    %157 = arith.cmpi slt, %153, %156 : vector<16x1xi32>
    %c0_i32_50 = arith.constant 0 : i32
    %158 = arith.cmpi slt, %151, %c0_i32_50 : i32
    %159 = vector.broadcast %158 : i1 to vector<16x1xi1>
    %160 = vector.broadcast %159 : vector<16x1xi1> to vector<16x1xi1>
    %161 = arith.xori %157, %160 : vector<16x1xi1>
    %162 = arith.andi %161, %155 : vector<16x1xi1>
    %163 = vector.broadcast %151 : i32 to vector<16x1xi32>
    %164 = arith.addi %153, %163 : vector<16x1xi32>
    %165 = arith.select %162, %164, %153 : vector<16x1xi1>, vector<16x1xi32>
    %c1024_i32_51 = arith.constant 1024 : i32
    %166 = vector.broadcast %c1024_i32_51 : i32 to vector<16x1xi32>
    %167 = arith.muli %165, %166 : vector<16x1xi32>
    %c1000003_i32_52 = arith.constant 1000003 : i32
    %c0_i32_53 = arith.constant 0 : i32
    %168 = arith.cmpi eq, %c1000003_i32_52, %c0_i32_53 : i32
    %c1_i32_54 = arith.constant 1 : i32
    %169 = arith.select %168, %c1_i32_54, %c1000003_i32_52 : i32
    %170 = vector.broadcast %169 : i32 to vector<16x1xi32>
    %171 = arith.remsi %167, %170 : vector<16x1xi32>
    %c0_i32_55 = arith.constant 0 : i32
    %172 = vector.broadcast %c0_i32_55 : i32 to vector<16x1xi32>
    %173 = arith.cmpi ne, %171, %172 : vector<16x1xi32>
    %c0_i32_56 = arith.constant 0 : i32
    %174 = vector.broadcast %c0_i32_56 : i32 to vector<16x1xi32>
    %175 = arith.cmpi slt, %171, %174 : vector<16x1xi32>
    %c0_i32_57 = arith.constant 0 : i32
    %176 = arith.cmpi slt, %169, %c0_i32_57 : i32
    %177 = vector.broadcast %176 : i1 to vector<16x1xi1>
    %178 = vector.broadcast %177 : vector<16x1xi1> to vector<16x1xi1>
    %179 = arith.xori %175, %178 : vector<16x1xi1>
    %180 = arith.andi %179, %173 : vector<16x1xi1>
    %181 = vector.broadcast %169 : i32 to vector<16x1xi32>
    %182 = arith.addi %171, %181 : vector<16x1xi32>
    %183 = arith.select %180, %182, %171 : vector<16x1xi1>, vector<16x1xi32>
    %c104729_i32_58 = arith.constant 104729 : i32
    %184 = vector.broadcast %c104729_i32_58 : i32 to vector<16x1xi32>
    %185 = arith.muli %184, %147 : vector<16x1xi32>
    %c1000003_i32_59 = arith.constant 1000003 : i32
    %c0_i32_60 = arith.constant 0 : i32
    %186 = arith.cmpi eq, %c1000003_i32_59, %c0_i32_60 : i32
    %c1_i32_61 = arith.constant 1 : i32
    %187 = arith.select %186, %c1_i32_61, %c1000003_i32_59 : i32
    %188 = vector.broadcast %187 : i32 to vector<16x1xi32>
    %189 = arith.remsi %185, %188 : vector<16x1xi32>
    %c0_i32_62 = arith.constant 0 : i32
    %190 = vector.broadcast %c0_i32_62 : i32 to vector<16x1xi32>
    %191 = arith.cmpi ne, %189, %190 : vector<16x1xi32>
    %c0_i32_63 = arith.constant 0 : i32
    %192 = vector.broadcast %c0_i32_63 : i32 to vector<16x1xi32>
    %193 = arith.cmpi slt, %189, %192 : vector<16x1xi32>
    %c0_i32_64 = arith.constant 0 : i32
    %194 = arith.cmpi slt, %187, %c0_i32_64 : i32
    %195 = vector.broadcast %194 : i1 to vector<16x1xi1>
    %196 = vector.broadcast %195 : vector<16x1xi1> to vector<16x1xi1>
    %197 = arith.xori %193, %196 : vector<16x1xi1>
    %198 = arith.andi %197, %191 : vector<16x1xi1>
    %199 = vector.broadcast %187 : i32 to vector<16x1xi32>
    %200 = arith.addi %189, %199 : vector<16x1xi32>
    %201 = arith.select %198, %200, %189 : vector<16x1xi1>, vector<16x1xi32>
    %202 = arith.addi %183, %201 : vector<16x1xi32>
    %c611953_i32 = arith.constant 611953 : i32
    %203 = vector.broadcast %c611953_i32 : i32 to vector<16x1xi32>
    %204 = arith.addi %202, %203 : vector<16x1xi32>
    %c1000003_i32_65 = arith.constant 1000003 : i32
    %c0_i32_66 = arith.constant 0 : i32
    %205 = arith.cmpi eq, %c1000003_i32_65, %c0_i32_66 : i32
    %c1_i32_67 = arith.constant 1 : i32
    %206 = arith.select %205, %c1_i32_67, %c1000003_i32_65 : i32
    %207 = vector.broadcast %206 : i32 to vector<16x1xi32>
    %208 = arith.remsi %204, %207 : vector<16x1xi32>
    %c0_i32_68 = arith.constant 0 : i32
    %209 = vector.broadcast %c0_i32_68 : i32 to vector<16x1xi32>
    %210 = arith.cmpi ne, %208, %209 : vector<16x1xi32>
    %c0_i32_69 = arith.constant 0 : i32
    %211 = vector.broadcast %c0_i32_69 : i32 to vector<16x1xi32>
    %212 = arith.cmpi slt, %208, %211 : vector<16x1xi32>
    %c0_i32_70 = arith.constant 0 : i32
    %213 = arith.cmpi slt, %206, %c0_i32_70 : i32
    %214 = vector.broadcast %213 : i1 to vector<16x1xi1>
    %215 = vector.broadcast %214 : vector<16x1xi1> to vector<16x1xi1>
    %216 = arith.xori %212, %215 : vector<16x1xi1>
    %217 = arith.andi %216, %210 : vector<16x1xi1>
    %218 = vector.broadcast %206 : i32 to vector<16x1xi32>
    %219 = arith.addi %208, %218 : vector<16x1xi32>
    %220 = arith.select %217, %219, %208 : vector<16x1xi1>, vector<16x1xi32>
    %c3_i32_71 = arith.constant 3 : i32
    %221 = vector.broadcast %c3_i32_71 : i32 to vector<16x1xi32>
    %222 = arith.andi %220, %221 : vector<16x1xi32>
    %c0_i32_72 = arith.constant 0 : i32
    %223 = vector.broadcast %c0_i32_72 : i32 to vector<16x1xi32>
    %224 = arith.select %21, %223, %222 : vector<16x1xi1>, vector<16x1xi32>
    %225 = vector.broadcast %224 : vector<16x1xi32> to vector<16x5xi32>
    %226 = arith.cmpi eq, %225, %22 : vector<16x5xi32>
    %227 = arith.extui %226 : vector<16x5xi1> to vector<16x5xi32>
    %228 = arith.sitofp %227 : vector<16x5xi32> to vector<16x5xf32>
    %229 = vector.broadcast %19 : vector<16x1xf32> to vector<16x5xf32>
    %230 = arith.mulf %229, %228 : vector<16x5xf32>
    %231 = arith.addf %127, %230 : vector<16x5xf32>
    %232 = vector.extract_strided_slice %231 {offsets = [0, 0], sizes = [16, 1], strides = [1, 1]} : vector<16x5xf32> to vector<16x1xf32>
    %233 = vector.extract_strided_slice %1 {offsets = [0, 0], sizes = [1, 32], strides = [1, 1]} : vector<5x32xf32> to vector<1x32xf32>
    %234 = vector.broadcast %232 : vector<16x1xf32> to vector<16x32xf32>
    %235 = vector.broadcast %233 : vector<1x32xf32> to vector<16x32xf32>
    %236 = arith.mulf %234, %235 : vector<16x32xf32>
    %237 = vector.extract_strided_slice %231 {offsets = [0, 1], sizes = [16, 1], strides = [1, 1]} : vector<16x5xf32> to vector<16x1xf32>
    %238 = vector.extract_strided_slice %1 {offsets = [1, 0], sizes = [1, 32], strides = [1, 1]} : vector<5x32xf32> to vector<1x32xf32>
    %239 = vector.broadcast %237 : vector<16x1xf32> to vector<16x32xf32>
    %240 = vector.broadcast %238 : vector<1x32xf32> to vector<16x32xf32>
    %241 = arith.mulf %239, %240 : vector<16x32xf32>
    %242 = arith.addf %236, %241 : vector<16x32xf32>
    %243 = vector.extract_strided_slice %231 {offsets = [0, 2], sizes = [16, 1], strides = [1, 1]} : vector<16x5xf32> to vector<16x1xf32>
    %244 = vector.extract_strided_slice %1 {offsets = [2, 0], sizes = [1, 32], strides = [1, 1]} : vector<5x32xf32> to vector<1x32xf32>
    %245 = vector.broadcast %243 : vector<16x1xf32> to vector<16x32xf32>
    %246 = vector.broadcast %244 : vector<1x32xf32> to vector<16x32xf32>
    %247 = arith.mulf %245, %246 : vector<16x32xf32>
    %248 = arith.addf %242, %247 : vector<16x32xf32>
    %249 = vector.extract_strided_slice %231 {offsets = [0, 3], sizes = [16, 1], strides = [1, 1]} : vector<16x5xf32> to vector<16x1xf32>
    %250 = vector.extract_strided_slice %1 {offsets = [3, 0], sizes = [1, 32], strides = [1, 1]} : vector<5x32xf32> to vector<1x32xf32>
    %251 = vector.broadcast %249 : vector<16x1xf32> to vector<16x32xf32>
    %252 = vector.broadcast %250 : vector<1x32xf32> to vector<16x32xf32>
    %253 = arith.mulf %251, %252 : vector<16x32xf32>
    %254 = arith.addf %248, %253 : vector<16x32xf32>
    %255 = vector.extract_strided_slice %231 {offsets = [0, 4], sizes = [16, 1], strides = [1, 1]} : vector<16x5xf32> to vector<16x1xf32>
    %256 = vector.extract_strided_slice %1 {offsets = [4, 0], sizes = [1, 32], strides = [1, 1]} : vector<5x32xf32> to vector<1x32xf32>
    %257 = vector.broadcast %255 : vector<16x1xf32> to vector<16x32xf32>
    %258 = vector.broadcast %256 : vector<1x32xf32> to vector<16x32xf32>
    %259 = arith.mulf %257, %258 : vector<16x32xf32>
    %260 = arith.addf %254, %259 : vector<16x32xf32>
    %c0_73 = arith.constant 0 : index
    %c0_74 = arith.constant 0 : index
    %261 = vector.load %arg4[%c0_73, %c0_74] : memref<16x32xf32, #tpu.memory_space<vmem>>, vector<16x32xf32>
    tpu.vector_store %arg4[%c0_73, %c0_74], %260 {strides = array<i32>} : memref<16x32xf32, #tpu.memory_space<vmem>>, vector<16x32xf32>,
    %262 = tpu.iota {dimensions = array<i32: 1>} : vector<16x2xi32>
    %cst_75 = arith.constant 0.000000e+00 : f32
    %263 = vector.broadcast %cst_75 : f32 to vector<16x2xf32>
    %c0_i32_76 = arith.constant 0 : i32
    %264 = vector.broadcast %c0_i32_76 : i32 to vector<16x2xi32>
    %265 = arith.cmpi eq, %262, %264 : vector<16x2xi32>
    %cst_77 = arith.constant 0.000000e+00 : f32
    %266 = vector.shape_cast %14 : vector<16x1xf32> to vector<16x1xf32>
    %267 = vector.broadcast %266 : vector<16x1xf32> to vector<16x2xf32>
    %268 = vector.broadcast %cst_77 : f32 to vector<16x2xf32>
    %269 = arith.select %265, %267, %268 : vector<16x2xi1>, vector<16x2xf32>
    %270 = arith.addf %263, %269 : vector<16x2xf32>
    %c1_i32_78 = arith.constant 1 : i32
    %271 = vector.broadcast %c1_i32_78 : i32 to vector<16x2xi32>
    %272 = arith.cmpi eq, %262, %271 : vector<16x2xi32>
    %cst_79 = arith.constant 0.000000e+00 : f32
    %273 = vector.shape_cast %19 : vector<16x1xf32> to vector<16x1xf32>
    %274 = vector.broadcast %273 : vector<16x1xf32> to vector<16x2xf32>
    %275 = vector.broadcast %cst_79 : f32 to vector<16x2xf32>
    %276 = arith.select %272, %274, %275 : vector<16x2xi1>, vector<16x2xf32>
    %277 = arith.addf %270, %276 : vector<16x2xf32>
    %c0_80 = arith.constant 0 : index
    %c0_81 = arith.constant 0 : index
    %278 = vector.load %arg5[%c0_80, %c0_81] : memref<16x2xf32, #tpu.memory_space<vmem>>, vector<16x2xf32>
    tpu.vector_store %arg5[%c0_80, %c0_81], %277 {strides = array<i32>} : memref<16x2xf32, #tpu.memory_space<vmem>>, vector<16x2xf32>,
    return
  }
  func.func @transform_0(%arg0: i32) -> (i32, i32) {
    %c0_i32 = arith.constant 0 : i32
    %c0_i32_0 = arith.constant 0 : i32
    return %arg0, %c0_i32 : i32, i32
  }
  func.func @transform_1(%arg0: i32) -> (i32, i32) {
    %c0_i32 = arith.constant 0 : i32
    %c0_i32_0 = arith.constant 0 : i32
    %c0_i32_1 = arith.constant 0 : i32
    return %c0_i32, %c0_i32_0 : i32, i32
  }
  func.func @transform_2(%arg0: i32) -> (i32, i32) {
    %c0_i32 = arith.constant 0 : i32
    %c0_i32_0 = arith.constant 0 : i32
    %c0_i32_1 = arith.constant 0 : i32
    return %c0_i32, %c0_i32_0 : i32, i32
  }
  func.func @transform_3(%arg0: i32) -> (i32, i32) {
    %c0_i32 = arith.constant 0 : i32
    %c0_i32_0 = arith.constant 0 : i32
    return %arg0, %c0_i32 : i32, i32
  }
  func.func @transform_4(%arg0: i32) -> (i32, i32) {
    %c0_i32 = arith.constant 0 : i32
    %c0_i32_0 = arith.constant 0 : i32
    return %arg0, %c0_i32 : i32, i32
  }
}

</mosaic_0001>

<llo_original>
// kernel: tpu_custom_call.1
$region0: #{tpu_custom_call.1}
  #allocation0 [shape = 'u32[]', space=smem, size = 0x4, offset = 0x4, fixed_abs, tag = 'smem constant byte address 0x4 - core index']
  #allocation1 [shape = 'u32[144,128]{1,0:T(1,128)}', space=vmem, size = 0x12000, scoped, tag = 'internal scratch']
  %s0 = inlined_call_operand.vmem [shape: s32[16,1], index: 0, kind: input, shape index: {}]
  %s1 = inlined_call_operand.vmem [shape: f32[5,32], index: 1, kind: input, shape index: {}]
  %s2 = inlined_call_operand.vmem [shape: f32[2,64], index: 2, kind: input, shape index: {}]
  %s3 = inlined_call_operand.hbm [shape: f32[16,32], index: 3, kind: output, shape index: {0}]
  %s4 = inlined_call_operand.vmem [shape: f32[16,2], index: 4, kind: output, shape index: {1}]
  %5 = xla_tuple %s3, %s4
  %s6 = sld [smem:[#allocation0]]
  $region30: #{tpu_custom_call.1} parent=0
    _
  %s8 = ssub.s32 1, %s6
  %s9 = scalar_select 0, %s8, %s6
  $region1: #{tpu_custom_call.1} parent=0
    #allocation2 [shape = 'u8[8192]{0}', space=vmem, size = 0x2000, scoped, tag = 'output window, operand 0, single buffered']
    #allocation3 [shape = 's32[1]{0}', space=sflag, size = 0x4, scoped, tag = 'scoped memory for tpu_custom_call.1']
    %10 = vsyncpa [#allocation3], 0
    // Predicated region
    $region2: #{tpu_custom_call.1} parent=1 // pred_check
      _
    $region3: #{tpu_custom_call.1} parent=1 // pred_check_branch
      %12 = sbr.rel (0) target = $region5
    $region4: #{tpu_custom_call.1} parent=1 // pred_region
      _
    $region5: #{tpu_custom_call.1} parent=1 // pred_fallthru
      _
    // Predicated region
    $region6: #{tpu_custom_call.1} parent=1 // pred_check
      _
    $region7: #{tpu_custom_call.1} parent=1 // pred_check_branch
      %14 = sbr.rel (0) target = $region9
    $region8: #{tpu_custom_call.1} parent=1 // pred_region
      _
    $region9: #{tpu_custom_call.1} parent=1 // pred_fallthru
      _
    // Predicated region
    $region10: #{tpu_custom_call.1} parent=1 // pred_check
      _
    $region11: #{tpu_custom_call.1} parent=1 // pred_check_branch
      %16 = sbr.rel (0) target = $region13
    $region12: #{tpu_custom_call.1} parent=1 // pred_region
      _
    $region13: #{tpu_custom_call.1} parent=1 // pred_fallthru
      _
    %v17 = vld [vmem:[%s0] sm:$0xff]
    %v18 = vld [vmem:[%s0 + $0x8] sm:$0xff]
    %v19 = vld [vmem:[%s1] sm:$0x1f]
    %v20 = vld [vmem:[%s2] sm:$0x3]
    %v21 = vand.u32 %v17, 63
    %v22 = vand.u32 %v18, 63
    %v23 = vlaneseq
    %v24 = vand.u32 %v23, 127
    %25 = vset.pattern.permute.xlu0 0
    %26 = vperm.xlu0 %25, %v21
    %v27 = vpop.permute.xlu0 %26
    %28 = vset.pattern.permute.xlu0 0
    %29 = vperm.xlu0 %28, %v22
    %v30 = vpop.permute.xlu0 %29
    %vm31 = vcmp.eq.s32.totalorder %v27, %v24
    %vm32 = vcmp.eq.s32.totalorder %v30, %v24
    %v33 = vsel %vm31, 1, 0
    %v34 = vsel %vm32, 1, 0
    %v35 = vcvt.s32.f32 %v33
    %v36 = vcvt.s32.f32 %v34
    %v37 = vlaneseq
    %v38 = vshrl.u32 %v37, 7
    %v39 = vsub.s32 0, %v38
    %v40 = vrot.slane %v20, %v39
    %v41 = vmul.f32 %v35, %v40
    %v42 = vmul.f32 %v36, %v40
    %vm43 = vcmask 523264
    %v44 = vsel %vm43, %v41, 0.0
    %45 = vadd.xlane.f32.xlu0 %v44
    %v46 = vpop.xlane.xlu0 %45
    %v47 = vsel %vm43, %v42, 0.0
    %48 = vadd.xlane.f32.xlu0 %v47
    %v49 = vpop.xlane.xlu0 %48
    %v50 = vlaneseq
    %v51 = vshrl.u32 %v50, 7
    %v52 = vsub.s32 1, %v51
    %v53 = vrot.slane %v20, %v52
    %v54 = vmul.f32 %v35, %v53
    %v55 = vmul.f32 %v36, %v53
    %v56 = vsel %vm43, %v54, 0.0
    %57 = vadd.xlane.f32.xlu0 %v56
    %v58 = vpop.xlane.xlu0 %57
    %v59 = vsel %vm43, %v55, 0.0
    %60 = vadd.xlane.f32.xlu0 %v59
    %v61 = vpop.xlane.xlu0 %60
    %vm62 = vcmp.eq.s32.totalorder %v17, 0
    %vm63 = vcmp.eq.s32.totalorder %v18, 0
    %vm64 = vcmp.lt.s32.totalorder %v17, 0
    %v65 = vsub.s32 0, %v17
    %v66 = vsel %vm64, %v65, %v17
    %v67 = vmul.u32.u64.compose %v66, 2251793058
    %v68 = vextract.low.u32 %v67
    %v69 = vextract.high.u32 %v67
    %vm70 = vc.u32 %v68, 2251793058
    %v71 = vsel %vm70, 1, 0
    %v72 = vadd.s32 %v69, %v71
    %v73 = vshrl.u32 %v72, 19
    %v74 = vmul.u32 %v73, 1000003
    %v75 = vsub.s32 %v66, %v74
    %v76 = vsub.s32 0, %v75
    %v77 = vsel %vm64, %v76, %v75
    %vm78 = vcmp.lt.s32.totalorder %v18, 0
    %v79 = vsub.s32 0, %v18
    %v80 = vsel %vm78, %v79, %v18
    %v81 = vmul.u32.u64.compose %v80, 2251793058
    %v82 = vextract.low.u32 %v81
    %v83 = vextract.high.u32 %v81
    %vm84 = vc.u32 %v82, 2251793058
    %v85 = vsel %vm84, 1, 0
    %v86 = vadd.s32 %v83, %v85
    %v87 = vshrl.u32 %v86, 19
    %v88 = vmul.u32 %v87, 1000003
    %v89 = vsub.s32 %v80, %v88
    %v90 = vsub.s32 0, %v89
    %v91 = vsel %vm78, %v90, %v89
    %vm92 = vcmp.ne.s32.totalorder %v77, 0
    %vm93 = vcmp.ne.s32.totalorder %v91, 0
    %vm94 = vcmp.lt.s32.totalorder %v77, 0
    %vm95 = vcmp.lt.s32.totalorder %v91, 0
    %vm96 = vmand %vm94, %vm92
    %vm97 = vmand %vm95, %vm93
    %v98 = vadd.s32 %v77, 1000003
    %v99 = vadd.s32 %v91, 1000003
    %v100 = vsel %vm96, %v98, %v77
    %v101 = vsel %vm97, %v99, %v91
    %v102 = vshra.s32 %v100, 10
    %v103 = vshra.s32 %v101, 10
    %v104 = vand.u32 %v100, 1023
    %v105 = vand.u32 %v101, 1023
    %v106 = vmul.u32 %v102, 7919
    %v107 = vmul.u32 %v103, 7919
    %vm108 = vcmp.lt.s32.totalorder %v106, 0
    %v109 = vsub.s32 0, %v106
    %v110 = vsel %vm108, %v109, %v106
    %v111 = vmul.u32.u64.compose %v110, 2251793058
    %v112 = vextract.low.u32 %v111
    %v113 = vextract.high.u32 %v111
    %vm114 = vc.u32 %v112, 2251793058
    %v115 = vsel %vm114, 1, 0
    %v116 = vadd.s32 %v113, %v115
    %v117 = vshrl.u32 %v116, 19
    %v118 = vmul.u32 %v117, 1000003
    %v119 = vsub.s32 %v110, %v118
    %v120 = vsub.s32 0, %v119
    %v121 = vsel %vm108, %v120, %v119
    %vm122 = vcmp.lt.s32.totalorder %v107, 0
    %v123 = vsub.s32 0, %v107
    %v124 = vsel %vm122, %v123, %v107
    %v125 = vmul.u32.u64.compose %v124, 2251793058
    %v126 = vextract.low.u32 %v125
    %v127 = vextract.high.u32 %v125
    %vm128 = vc.u32 %v126, 2251793058
    %v129 = vsel %vm128, 1, 0
    %v130 = vadd.s32 %v127, %v129
    %v131 = vshrl.u32 %v130, 19
    %v132 = vmul.u32 %v131, 1000003
    %v133 = vsub.s32 %v124, %v132
    %v134 = vsub.s32 0, %v133
    %v135 = vsel %vm122, %v134, %v133
    %vm136 = vcmp.ne.s32.totalorder %v121, 0
    %vm137 = vcmp.ne.s32.totalorder %v135, 0
    %vm138 = vcmp.lt.s32.totalorder %v121, 0
    %vm139 = vcmp.lt.s32.totalorder %v135, 0
    %vm140 = vmand %vm138, %vm136
    %vm141 = vmand %vm139, %vm137
    %v142 = vadd.s32 %v121, 1000003
    %v143 = vadd.s32 %v135, 1000003
    %v144 = vsel %vm140, %v142, %v121
    %v145 = vsel %vm141, %v143, %v135
    %v146 = vmul.u32 %v144, 1024
    %v147 = vmul.u32 %v145, 1024
    %vm148 = vcmp.lt.s32.totalorder %v146, 0
    %v149 = vsub.s32 0, %v146
    %v150 = vsel %vm148, %v149, %v146
    %v151 = vmul.u32.u64.compose %v150, 2251793058
    %v152 = vextract.low.u32 %v151
    %v153 = vextract.high.u32 %v151
    %vm154 = vc.u32 %v152, 2251793058
    %v155 = vsel %vm154, 1, 0
    %v156 = vadd.s32 %v153, %v155
    %v157 = vshrl.u32 %v156, 19
    %v158 = vmul.u32 %v157, 1000003
    %v159 = vsub.s32 %v150, %v158
    %v160 = vsub.s32 0, %v159
    %v161 = vsel %vm148, %v160, %v159
    %vm162 = vcmp.lt.s32.totalorder %v147, 0
    %v163 = vsub.s32 0, %v147
    %v164 = vsel %vm162, %v163, %v147
    %v165 = vmul.u32.u64.compose %v164, 2251793058
    %v166 = vextract.low.u32 %v165
    %v167 = vextract.high.u32 %v165
    %vm168 = vc.u32 %v166, 2251793058
    %v169 = vsel %vm168, 1, 0
    %v170 = vadd.s32 %v167, %v169
    %v171 = vshrl.u32 %v170, 19
    %v172 = vmul.u32 %v171, 1000003
    %v173 = vsub.s32 %v164, %v172
    %v174 = vsub.s32 0, %v173
    %v175 = vsel %vm162, %v174, %v173
    %vm176 = vcmp.ne.s32.totalorder %v161, 0
    %vm177 = vcmp.ne.s32.totalorder %v175, 0
    %vm178 = vcmp.lt.s32.totalorder %v161, 0
    %vm179 = vcmp.lt.s32.totalorder %v175, 0
    %vm180 = vmand %vm178, %vm176
    %vm181 = vmand %vm179, %vm177
    %v182 = vadd.s32 %v161, 1000003
    %v183 = vadd.s32 %v175, 1000003
    %v184 = vsel %vm180, %v182, %v161
    %v185 = vsel %vm181, %v183, %v175
    %v186 = vmul.u32 %v104, 7919
    %v187 = vmul.u32 %v105, 7919
    %vm188 = vcmp.lt.s32.totalorder %v186, 0
    %v189 = vsub.s32 0, %v186
    %v190 = vsel %vm188, %v189, %v186
    %v191 = vmul.u32.u64.compose %v190, 2251793058
    %v192 = vextract.low.u32 %v191
    %v193 = vextract.high.u32 %v191
    %vm194 = vc.u32 %v192, 2251793058
    %v195 = vsel %vm194, 1, 0
    %v196 = vadd.s32 %v193, %v195
    %v197 = vshrl.u32 %v196, 19
    %v198 = vmul.u32 %v197, 1000003
    %v199 = vsub.s32 %v190, %v198
    %v200 = vsub.s32 0, %v199
    %v201 = vsel %vm188, %v200, %v199
    %vm202 = vcmp.lt.s32.totalorder %v187, 0
    %v203 = vsub.s32 0, %v187
    %v204 = vsel %vm202, %v203, %v187
    %v205 = vmul.u32.u64.compose %v204, 2251793058
    %v206 = vextract.low.u32 %v205
    %v207 = vextract.high.u32 %v205
    %vm208 = vc.u32 %v206, 2251793058
    %v209 = vsel %vm208, 1, 0
    %v210 = vadd.s32 %v207, %v209
    %v211 = vshrl.u32 %v210, 19
    %v212 = vmul.u32 %v211, 1000003
    %v213 = vsub.s32 %v204, %v212
    %v214 = vsub.s32 0, %v213
    %v215 = vsel %vm202, %v214, %v213
    %vm216 = vcmp.ne.s32.totalorder %v201, 0
    %vm217 = vcmp.ne.s32.totalorder %v215, 0
    %vm218 = vcmp.lt.s32.totalorder %v201, 0
    %vm219 = vcmp.lt.s32.totalorder %v215, 0
    %vm220 = vmand %vm218, %vm216
    %vm221 = vmand %vm219, %vm217
    %v222 = vadd.s32 %v201, 1000003
    %v223 = vadd.s32 %v215, 1000003
    %v224 = vsel %vm220, %v222, %v201
    %v225 = vsel %vm221, %v223, %v215
    %v226 = vadd.s32 %v184, %v224
    %v227 = vadd.s32 %v185, %v225
    %v228 = vadd.s32 %v226, 50021
    %v229 = vadd.s32 %v227, 50021
    %vm230 = vcmp.lt.s32.totalorder %v228, 0
    %v231 = vsub.s32 0, %v228
    %v232 = vsel %vm230, %v231, %v228
    %v233 = vmul.u32.u64.compose %v232, 2251793058
    %v234 = vextract.low.u32 %v233
    %v235 = vextract.high.u32 %v233
    %vm236 = vc.u32 %v234, 2251793058
    %v237 = vsel %vm236, 1, 0
    %v238 = vadd.s32 %v235, %v237
    %v239 = vshrl.u32 %v238, 19
    %v240 = vmul.u32 %v239, 1000003
    %v241 = vsub.s32 %v232, %v240
    %v242 = vsub.s32 0, %v241
    %v243 = vsel %vm230, %v242, %v241
    %vm244 = vcmp.lt.s32.totalorder %v229, 0
    %v245 = vsub.s32 0, %v229
    %v246 = vsel %vm244, %v245, %v229
    %v247 = vmul.u32.u64.compose %v246, 2251793058
    %v248 = vextract.low.u32 %v247
    %v249 = vextract.high.u32 %v247
    %vm250 = vc.u32 %v248, 2251793058
    %v251 = vsel %vm250, 1, 0
    %v252 = vadd.s32 %v249, %v251
    %v253 = vshrl.u32 %v252, 19
    %v254 = vmul.u32 %v253, 1000003
    %v255 = vsub.s32 %v246, %v254
    %v256 = vsub.s32 0, %v255
    %v257 = vsel %vm244, %v256, %v255
    %vm258 = vcmp.ne.s32.totalorder %v243, 0
    %vm259 = vcmp.ne.s32.totalorder %v257, 0
    %vm260 = vcmp.lt.s32.totalorder %v243, 0
    %vm261 = vcmp.lt.s32.totalorder %v257, 0
    %vm262 = vmand %vm260, %vm258
    %vm263 = vmand %vm261, %vm259
    %v264 = vadd.s32 %v243, 1000003
    %v265 = vadd.s32 %v257, 1000003
    %v266 = vsel %vm262, %v264, %v243
    %v267 = vsel %vm263, %v265, %v257
    %v268 = vand.u32 %v266, 3
    %v269 = vand.u32 %v267, 3
    %v270 = vsel %vm62, 0, %v268
    %v271 = vsel %vm63, 0, %v269
    %272 = vset.pattern.permute.xlu0 0
    %273 = vperm.xlu0 %272, %v270
    %v274 = vpop.permute.xlu0 %273
    %275 = vset.pattern.permute.xlu0 0
    %276 = vperm.xlu0 %275, %v271
    %v277 = vpop.permute.xlu0 %276
    %vm278 = vcmp.eq.s32.totalorder %v274, %v24
    %vm279 = vcmp.eq.s32.totalorder %v277, %v24
    %v280 = vsel %vm278, 1, 0
    %v281 = vsel %vm279, 1, 0
    %v282 = vcvt.s32.f32 %v280
    %v283 = vcvt.s32.f32 %v281
    %v284 = vmul.f32 %v46, %v282
    %v285 = vmul.f32 %v49, %v283
    %v286 = vadd.f32 %v284, 0.0
    %v287 = vadd.f32 %v285, 0.0
    %v288 = vmul.u32 %v102, 104729
    %v289 = vmul.u32 %v103, 104729
    %vm290 = vcmp.lt.s32.totalorder %v288, 0
    %v291 = vsub.s32 0, %v288
    %v292 = vsel %vm290, %v291, %v288
    %v293 = vmul.u32.u64.compose %v292, 2251793058
    %v294 = vextract.low.u32 %v293
    %v295 = vextract.high.u32 %v293
    %vm296 = vc.u32 %v294, 2251793058
    %v297 = vsel %vm296, 1, 0
    %v298 = vadd.s32 %v295, %v297
    %v299 = vshrl.u32 %v298, 19
    %v300 = vmul.u32 %v299, 1000003
    %v301 = vsub.s32 %v292, %v300
    %v302 = vsub.s32 0, %v301
    %v303 = vsel %vm290, %v302, %v301
    %vm304 = vcmp.lt.s32.totalorder %v289, 0
    %v305 = vsub.s32 0, %v289
    %v306 = vsel %vm304, %v305, %v289
    %v307 = vmul.u32.u64.compose %v306, 2251793058
    %v308 = vextract.low.u32 %v307
    %v309 = vextract.high.u32 %v307
    %vm310 = vc.u32 %v308, 2251793058
    %v311 = vsel %vm310, 1, 0
    %v312 = vadd.s32 %v309, %v311
    %v313 = vshrl.u32 %v312, 19
    %v314 = vmul.u32 %v313, 1000003
    %v315 = vsub.s32 %v306, %v314
    %v316 = vsub.s32 0, %v315
    %v317 = vsel %vm304, %v316, %v315
    %vm318 = vcmp.ne.s32.totalorder %v303, 0
    %vm319 = vcmp.ne.s32.totalorder %v317, 0
    %vm320 = vcmp.lt.s32.totalorder %v303, 0
    %vm321 = vcmp.lt.s32.totalorder %v317, 0
    %vm322 = vmand %vm320, %vm318
    %vm323 = vmand %vm321, %vm319
    %v324 = vadd.s32 %v303, 1000003
    %v325 = vadd.s32 %v317, 1000003
    %v326 = vsel %vm322, %v324, %v303
    %v327 = vsel %vm323, %v325, %v317
    %v328 = vmul.u32 %v326, 1024
    %v329 = vmul.u32 %v327, 1024
    %vm330 = vcmp.lt.s32.totalorder %v328, 0
    %v331 = vsub.s32 0, %v328
    %v332 = vsel %vm330, %v331, %v328
    %v333 = vmul.u32.u64.compose %v332, 2251793058
    %v334 = vextract.low.u32 %v333
    %v335 = vextract.high.u32 %v333
    %vm336 = vc.u32 %v334, 2251793058
    %v337 = vsel %vm336, 1, 0
    %v338 = vadd.s32 %v335, %v337
    %v339 = vshrl.u32 %v338, 19
    %v340 = vmul.u32 %v339, 1000003
    %v341 = vsub.s32 %v332, %v340
    %v342 = vsub.s32 0, %v341
    %v343 = vsel %vm330, %v342, %v341
    %vm344 = vcmp.lt.s32.totalorder %v329, 0
    %v345 = vsub.s32 0, %v329
    %v346 = vsel %vm344, %v345, %v329
    %v347 = vmul.u32.u64.compose %v346, 2251793058
    %v348 = vextract.low.u32 %v347
    %v349 = vextract.high.u32 %v347
    %vm350 = vc.u32 %v348, 2251793058
    %v351 = vsel %vm350, 1, 0
    %v352 = vadd.s32 %v349, %v351
    %v353 = vshrl.u32 %v352, 19
    %v354 = vmul.u32 %v353, 1000003
    %v355 = vsub.s32 %v346, %v354
    %v356 = vsub.s32 0, %v355
    %v357 = vsel %vm344, %v356, %v355
    %vm358 = vcmp.ne.s32.totalorder %v343, 0
    %vm359 = vcmp.ne.s32.totalorder %v357, 0
    %vm360 = vcmp.lt.s32.totalorder %v343, 0
    %vm361 = vcmp.lt.s32.totalorder %v357, 0
    %vm362 = vmand %vm360, %vm358
    %vm363 = vmand %vm361, %vm359
    %v364 = vadd.s32 %v343, 1000003
    %v365 = vadd.s32 %v357, 1000003
    %v366 = vsel %vm362, %v364, %v343
    %v367 = vsel %vm363, %v365, %v357
    %v368 = vmul.u32 %v104, 104729
    %v369 = vmul.u32 %v105, 104729
    %vm370 = vcmp.lt.s32.totalorder %v368, 0
    %v371 = vsub.s32 0, %v368
    %v372 = vsel %vm370, %v371, %v368
    %v373 = vmul.u32.u64.compose %v372, 2251793058
    %v374 = vextract.low.u32 %v373
    %v375 = vextract.high.u32 %v373
    %vm376 = vc.u32 %v374, 2251793058
    %v377 = vsel %vm376, 1, 0
    %v378 = vadd.s32 %v375, %v377
    %v379 = vshrl.u32 %v378, 19
    %v380 = vmul.u32 %v379, 1000003
    %v381 = vsub.s32 %v372, %v380
    %v382 = vsub.s32 0, %v381
    %v383 = vsel %vm370, %v382, %v381
    %vm384 = vcmp.lt.s32.totalorder %v369, 0
    %v385 = vsub.s32 0, %v369
    %v386 = vsel %vm384, %v385, %v369
    %v387 = vmul.u32.u64.compose %v386, 2251793058
    %v388 = vextract.low.u32 %v387
    %v389 = vextract.high.u32 %v387
    %vm390 = vc.u32 %v388, 2251793058
    %v391 = vsel %vm390, 1, 0
    %v392 = vadd.s32 %v389, %v391
    %v393 = vshrl.u32 %v392, 19
    %v394 = vmul.u32 %v393, 1000003
    %v395 = vsub.s32 %v386, %v394
    %v396 = vsub.s32 0, %v395
    %v397 = vsel %vm384, %v396, %v395
    %vm398 = vcmp.ne.s32.totalorder %v383, 0
    %vm399 = vcmp.ne.s32.totalorder %v397, 0
    %vm400 = vcmp.lt.s32.totalorder %v383, 0
    %vm401 = vcmp.lt.s32.totalorder %v397, 0
    %vm402 = vmand %vm400, %vm398
    %vm403 = vmand %vm401, %vm399
    %v404 = vadd.s32 %v383, 1000003
    %v405 = vadd.s32 %v397, 1000003
    %v406 = vsel %vm402, %v404, %v383
    %v407 = vsel %vm403, %v405, %v397
    %v408 = vadd.s32 %v366, %v406
    %v409 = vadd.s32 %v367, %v407
    %v410 = vadd.s32 %v408, 611953
    %v411 = vadd.s32 %v409, 611953
    %vm412 = vcmp.lt.s32.totalorder %v410, 0
    %v413 = vsub.s32 0, %v410
    %v414 = vsel %vm412, %v413, %v410
    %v415 = vmul.u32.u64.compose %v414, 2251793058
    %v416 = vextract.low.u32 %v415
    %v417 = vextract.high.u32 %v415
    %vm418 = vc.u32 %v416, 2251793058
    %v419 = vsel %vm418, 1, 0
    %v420 = vadd.s32 %v417, %v419
    %v421 = vshrl.u32 %v420, 19
    %v422 = vmul.u32 %v421, 1000003
    %v423 = vsub.s32 %v414, %v422
    %v424 = vsub.s32 0, %v423
    %v425 = vsel %vm412, %v424, %v423
    %vm426 = vcmp.lt.s32.totalorder %v411, 0
    %v427 = vsub.s32 0, %v411
    %v428 = vsel %vm426, %v427, %v411
    %v429 = vmul.u32.u64.compose %v428, 2251793058
    %v430 = vextract.low.u32 %v429
    %v431 = vextract.high.u32 %v429
    %vm432 = vc.u32 %v430, 2251793058
    %v433 = vsel %vm432, 1, 0
    %v434 = vadd.s32 %v431, %v433
    %v435 = vshrl.u32 %v434, 19
    %v436 = vmul.u32 %v435, 1000003
    %v437 = vsub.s32 %v428, %v436
    %v438 = vsub.s32 0, %v437
    %v439 = vsel %vm426, %v438, %v437
    %vm440 = vcmp.ne.s32.totalorder %v425, 0
    %vm441 = vcmp.ne.s32.totalorder %v439, 0
    %vm442 = vcmp.lt.s32.totalorder %v425, 0
    %vm443 = vcmp.lt.s32.totalorder %v439, 0
    %vm444 = vmand %vm442, %vm440
    %vm445 = vmand %vm443, %vm441
    %v446 = vadd.s32 %v425, 1000003
    %v447 = vadd.s32 %v439, 1000003
    %v448 = vsel %vm444, %v446, %v425
    %v449 = vsel %vm445, %v447, %v439
    %v450 = vand.u32 %v448, 3
    %v451 = vand.u32 %v449, 3
    %v452 = vsel %vm62, 0, %v450
    %v453 = vsel %vm63, 0, %v451
    %454 = vset.pattern.permute.xlu0 0
    %455 = vperm.xlu0 %454, %v452
    %v456 = vpop.permute.xlu0 %455
    %457 = vset.pattern.permute.xlu0 0
    %458 = vperm.xlu0 %457, %v453
    %v459 = vpop.permute.xlu0 %458
    %vm460 = vcmp.eq.s32.totalorder %v456, %v24
    %vm461 = vcmp.eq.s32.totalorder %v459, %v24
    %v462 = vsel %vm460, 1, 0
    %v463 = vsel %vm461, 1, 0
    %v464 = vcvt.s32.f32 %v462
    %v465 = vcvt.s32.f32 %v463
    %v466 = vmul.f32 %v58, %v464
    %v467 = vmul.f32 %v61, %v465
    %v468 = vadd.f32 %v286, %v466
    %v469 = vadd.f32 %v287, %v467
    %471 = vset.pattern.permute.xlu0 0
    %472 = vperm.xlu0 %471, %v468
    %v473 = vpop.permute.xlu0 %472
    %476 = vset.pattern.permute.xlu0 0
    %477 = vperm.xlu0 %476, %v469
    %v478 = vpop.permute.xlu0 %477
    %v480 = vlaneseq
    %v481 = vshrl.u32 %v480, 7
    %v482 = vsub.s32 0, %v481
    %v483 = vrot.slane %v19, %v482
    %v484 = vmul.f32 %v473, %v483
    %v485 = vmul.f32 %v478, %v483
    %486 = vset.pattern.permute.xlu0 1
    %487 = vperm.xlu0 %486, %v468
    %v488 = vpop.permute.xlu0 %487
    %490 = vset.pattern.permute.xlu0 1
    %491 = vperm.xlu0 %490, %v469
    %v492 = vpop.permute.xlu0 %491
    %v494 = vlaneseq
    %v495 = vshrl.u32 %v494, 7
    %v496 = vsub.s32 1, %v495
    %v497 = vrot.slane %v19, %v496
    %v498 = vmul.f32 %v488, %v497
    %v499 = vmul.f32 %v492, %v497
    %v500 = vadd.f32 %v484, %v498
    %v501 = vadd.f32 %v485, %v499
    %502 = vset.pattern.permute.xlu0 2
    %503 = vperm.xlu0 %502, %v468
    %v504 = vpop.permute.xlu0 %503
    %506 = vset.pattern.permute.xlu0 2
    %507 = vperm.xlu0 %506, %v469
    %v508 = vpop.permute.xlu0 %507
    %v510 = vlaneseq
    %v511 = vshrl.u32 %v510, 7
    %v512 = vsub.s32 2, %v511
    %v513 = vrot.slane %v19, %v512
    %v514 = vmul.f32 %v504, %v513
    %v515 = vmul.f32 %v508, %v513
    %v516 = vadd.f32 %v500, %v514
    %v517 = vadd.f32 %v501, %v515
    %518 = vset.pattern.permute.xlu0 3
    %519 = vperm.xlu0 %518, %v468
    %v520 = vpop.permute.xlu0 %519
    %522 = vset.pattern.permute.xlu0 3
    %523 = vperm.xlu0 %522, %v469
    %v524 = vpop.permute.xlu0 %523
    %v526 = vlaneseq
    %v527 = vshrl.u32 %v526, 7
    %v528 = vsub.s32 3, %v527
    %v529 = vrot.slane %v19, %v528
    %v530 = vmul.f32 %v520, %v529
    %v531 = vmul.f32 %v524, %v529
    %v532 = vadd.f32 %v516, %v530
    %v533 = vadd.f32 %v517, %v531
    %534 = vset.pattern.permute.xlu0 4
    %535 = vperm.xlu0 %534, %v468
    %v536 = vpop.permute.xlu0 %535
    %538 = vset.pattern.permute.xlu0 4
    %539 = vperm.xlu0 %538, %v469
    %v540 = vpop.permute.xlu0 %539
    %v542 = vlaneseq
    %v543 = vshrl.u32 %v542, 7
    %v544 = vsub.s32 4, %v543
    %v545 = vrot.slane %v19, %v544
    %v546 = vmul.f32 %v536, %v545
    %v547 = vmul.f32 %v540, %v545
    %v548 = vadd.f32 %v532, %v546
    %v549 = vadd.f32 %v533, %v547
    %vm550 = vcmask 261120
    %551 = vst.msk [vmem:[#allocation2] sm:$0xff] %vm550, %v548
    %552 = vst.msk [vmem:[#allocation2 + $0x8] sm:$0xff] %vm550, %v549
    %vm553 = vcmp.eq.s32.totalorder %v24, 0
    %v554 = vsel %vm553, %v46, 0.0
    %v555 = vsel %vm553, %v49, 0.0
    %v556 = vadd.f32 %v554, 0.0
    %v557 = vadd.f32 %v555, 0.0
    %vm558 = vcmp.eq.s32.totalorder %v24, 1
    %v559 = vsel %vm558, %v58, 0.0
    %v560 = vsel %vm558, %v61, 0.0
    %v561 = vadd.f32 %v556, %v559
    %v562 = vadd.f32 %v557, %v560
    %vm563 = vcmask 15360
    %564 = vst.msk [vmem:[%s4] sm:$0xff] %vm563, %v561
    %565 = vst.msk [vmem:[%s4 + $0x8] sm:$0xff] %vm563, %v562
    // Predicated region
    $region14: #{tpu_custom_call.1} parent=1 // pred_check
      _
    $region15: #{tpu_custom_call.1} parent=1 // pred_check_branch
      %567 = sbr.rel (0) target = $region17
    $region16: #{tpu_custom_call.1} parent=1 // pred_region
      %s569 = ssub.s32 256, 256
      %570 = vsyncadd [#allocation3], %s569
      %s571 = sshll.u32 [#allocation2], 4
      %s572 = int_to_ptr.vmem [resolvable:$true] %s571
      %577 = dma.vmem_to_hbm [thread:$0]  %s572, 256, %s3, [#allocation3], 128, 128, 8
    $region17: #{tpu_custom_call.1} parent=1 // pred_fallthru
      _
    // Predicated region
    $region18: #{tpu_custom_call.1} parent=1 // pred_check
      _
    $region19: #{tpu_custom_call.1} parent=1 // pred_check_branch
      %579 = sbr.rel (0) target = $region21
    $region20: #{tpu_custom_call.1} parent=1 // pred_region
      _
    $region21: #{tpu_custom_call.1} parent=1 // pred_fallthru
      _
    // Predicated region
    $region22: #{tpu_custom_call.1} parent=1 // pred_check
      _
    $region23: #{tpu_custom_call.1} parent=1 // pred_check_branch
      %581 = sbr.rel (0) target = $region25
    $region24: #{tpu_custom_call.1} parent=1 // pred_region
      %582 = dma.done [#allocation3], 256
    $region25: #{tpu_custom_call.1} parent=1 // pred_fallthru
      _
    // Predicated region
    $region26: #{tpu_custom_call.1} parent=1 // pred_check
      _
    $region27: #{tpu_custom_call.1} parent=1 // pred_check_branch
      %584 = sbr.rel (0) target = $region29
    $region28: #{tpu_custom_call.1} parent=1 // pred_region
      _
    $region29: #{tpu_custom_call.1} parent=1 // pred_fallthru
      _
    %585 = vsyncpa [#allocation3], 1

</llo_original>
